<compile_context>
chip_gen: v6e
topology: v6e:2x2x1
jax: 0.10.0
libtpu: 0.0.40
codegen_flags: <defaults>
</compile_context>

<pallas_src>
import jax
import jax.numpy as jnp
from jax.experimental import pallas as pl
from jax.experimental.pallas import tpu as pltpu


# ----------------------------- kernels ---------------------------------------

def mlp_kernel_fused(x_ref, w1_ref, b1_ref, w2_ref, b2_ref, o_ref):
    """One grid step = one batch tile; full weights VMEM-resident."""
    # fc1: (TB, I) @ (I, H), bf16 inputs, f32 accumulate; bias + ReLU in f32.
    h = jnp.dot(x_ref[...], w1_ref[...], preferred_element_type=jnp.float32)
    h = jnp.maximum(h + b1_ref[...], 0.0)
    # fc2: (TB, H) @ (H, O).
    y = jnp.dot(h.astype(jnp.bfloat16), w2_ref[...],
                preferred_element_type=jnp.float32)
    y = y + b2_ref[...]
    # 0.7 + 0.2*sigmoid(y) == 0.8 + 0.1*tanh(y/2): single EUP op, exact.
    o_ref[...] = (0.8 + 0.1 * jnp.tanh(0.5 * y)).astype(o_ref.dtype)


def mlp_kernel_htiled(x_ref, w1_ref, b1_ref, w2_ref, b2_ref, o_ref, acc_ref):
    """H-tiled variant: grid = (batch tiles, H tiles), H axis last/"arbitrary".

    Per H tile: partial fc1 (+bias, ReLU) then fc2 partial accumulated into a
    (TB, O_p) f32 VMEM scratch; bias2 + tanh rescale applied on the last step.
    """
    hk = pl.program_id(1)

    @pl.when(hk == 0)
    def _():
        acc_ref[...] = jnp.zeros_like(acc_ref)

    h = jnp.dot(x_ref[...], w1_ref[...], preferred_element_type=jnp.float32)
    h = jnp.maximum(h + b1_ref[...], 0.0)
    acc_ref[...] += jnp.dot(h.astype(jnp.bfloat16), w2_ref[...],
                            preferred_element_type=jnp.float32)

    @pl.when(hk == pl.num_programs(1) - 1)
    def _():
        y = acc_ref[...] + b2_ref[...]
        o_ref[...] = (0.8 + 0.1 * jnp.tanh(0.5 * y)).astype(o_ref.dtype)


# ----------------------------- helpers ----------------------------------------

def _round_up(n, m):
    return ((n + m - 1) // m) * m


def _vmem_capacity_bytes():
    """Per-core VMEM capacity; conservative 64 MiB fallback (v7x) if the query fails."""
    try:
        return int(pltpu.get_tpu_info().vmem_capacity_bytes)
    except Exception:
        return 64 * 1024 * 1024


def prepare_params(w1, b1, w2, b2):
    """One-time padding + bf16 cast of the parameters (hoisted out of forward).

    w1: (I, H), b1: (H,), w2: (H, O), b2: (O,). Feature dims are zero-padded to
    multiples of 128 (lane-dense); padding is exact (contributes zeros)."""
    I, H = w1.shape
    O = w2.shape[1]
    I_p, H_p, O_p = _round_up(I, 128), _round_up(H, 128), _round_up(O, 128)
    w1_p = jnp.zeros((I_p, H_p), jnp.bfloat16).at[:I, :H].set(w1.astype(jnp.bfloat16))
    b1_p = jnp.zeros((1, H_p), jnp.float32).at[0, :H].set(
        b1.astype(jnp.float32).reshape(H))
    w2_p = jnp.zeros((H_p, O_p), jnp.bfloat16).at[:H, :O].set(w2.astype(jnp.bfloat16))
    b2_p = jnp.zeros((1, O_p), jnp.float32).at[0, :O].set(
        b2.astype(jnp.float32).reshape(O))
    return (w1_p, b1_p, w2_p, b2_p, (I, H, O))


def mlp_forward(x, params, *, block_b=256, tile_h=512,
                out_dtype=jnp.float32, force_h_tiled=False):
    """x: (B, I) float; params from prepare_params(). Returns (B, O) out_dtype.

    out_dtype=jnp.bfloat16 halves output writeback bytes if downstream tolerates it."""
    w1_p, b1_p, w2_p, b2_p, (I, H, O) = params
    I_p, H_p = w1_p.shape
    O_p = w2_p.shape[1]
    B = x.shape[0]
    assert x.shape[1] == I, (x.shape, I)

    # ---- batch tile: >= 2 grid steps when batch allows (feeds both TCs on v7x) ----
    TB = min(block_b, _round_up(B, 8))
    B_p = _round_up(B, TB)
    if B_p // TB < 2 and B >= 16:
        TB = _round_up((B + 1) // 2, 8)
        B_p = _round_up(B, TB)

    # ---- x streamed in bf16; fast path skips the pad copy when already aligned ----
    if B == B_p and I == I_p:
        x_p = x.astype(jnp.bfloat16)
    else:
        x_p = jnp.zeros((B_p, I_p), jnp.bfloat16).at[:B, :I].set(
            x.astype(jnp.bfloat16))

    out_bytes = jnp.dtype(out_dtype).itemsize
    budget_cap = max(int(0.75 * _vmem_capacity_bytes()), 16 * 1024 * 1024)

    # Fused-path VMEM estimate: single-buffered bf16 weights + f32 biases,
    # double-buffered bf16 x / out tiles, f32+bf16 hidden intermediates.
    weight_bytes = (I_p * H_p + H_p * O_p) * 2
    bias_bytes = (H_p + O_p) * 4
    est_fused = (weight_bytes + 2 * bias_bytes
                 + 2 * TB * I_p * 2 + 2 * TB * O_p * out_bytes
                 + TB * H_p * (4 + 2) + TB * O_p * 4)
    use_h_tiled = force_h_tiled or int(1.5 * est_fused) > budget_cap

    if not use_h_tiled:
        # ------------------ fused path: full weights VMEM-resident ------------------
        vmem_limit = int(min(max(int(1.5 * est_fused), 16 * 1024 * 1024), budget_cap))
        grid = (B_p // TB,)

        def build(single_buffer_weights):
            # Grid-invariant operands (constant index_map) don't need double
            # buffering; Buffered(1) halves their resident VMEM footprint.
            wkw = dict(pipeline_mode=pl.Buffered(1)) if single_buffer_weights else {}
            return pl.pallas_call(
                mlp_kernel_fused,
                out_shape=jax.ShapeDtypeStruct((B_p, O_p), out_dtype),
                grid=grid,
                in_specs=[
                    pl.BlockSpec((TB, I_p), lambda i: (i, 0)),          # x: streamed
                    pl.BlockSpec((I_p, H_p), lambda i: (0, 0), **wkw),  # w1: resident
                    pl.BlockSpec((1, H_p), lambda i: (0, 0), **wkw),    # b1: resident
                    pl.BlockSpec((H_p, O_p), lambda i: (0, 0), **wkw),  # w2: resident
                    pl.BlockSpec((1, O_p), lambda i: (0, 0), **wkw),    # b2: resident
                ],
                out_specs=pl.BlockSpec((TB, O_p), lambda i: (i, 0)),
                compiler_params=pltpu.CompilerParams(
                    dimension_semantics=("parallel",),       # 2-TC sharding on v7x
                    vmem_limit_bytes=vmem_limit,
                ),
            )

        try:
            out_p = build(True)(x_p, w1_p, b1_p, w2_p, b2_p)
        except Exception:
            # pipeline_mode=Buffered(1) unsupported on this jax version: fall back
            # to default double-buffering of the (grid-invariant) weights.
            out_p = build(False)(x_p, w1_p, b1_p, w2_p, b2_p)
    else:
        # --------------- H-tiled path: bounded VMEM regardless of H -----------------
        # Largest multiple-of-128 divisor of H_p that is <= tile_h.
        max_th = max(128, min(_round_up(tile_h, 128), H_p))
        TH, t = 128, 128
        while t <= max_th:
            if H_p % t == 0:
                TH = t
            t += 128

        est_ht = (2 * (TB * I_p * 2 + I_p * TH * 2 + TH * 4
                       + TH * O_p * 2 + O_p * 4 + TB * O_p * out_bytes)
                  + TB * O_p * 4            # accumulator scratch
                  + TB * TH * (4 + 2))      # hidden intermediates
        vmem_limit = int(min(max(int(1.5 * est_ht), 16 * 1024 * 1024), budget_cap))
        grid = (B_p // TB, H_p // TH)

        out_p = pl.pallas_call(
            mlp_kernel_htiled,
            out_shape=jax.ShapeDtypeStruct((B_p, O_p), out_dtype),
            grid=grid,
            in_specs=[
                pl.BlockSpec((TB, I_p), lambda i, k: (i, 0)),   # x: resident per batch tile
                pl.BlockSpec((I_p, TH), lambda i, k: (0, k)),   # w1 H-slab
                pl.BlockSpec((1, TH), lambda i, k: (0, k)),     # b1 H-slab
                pl.BlockSpec((TH, O_p), lambda i, k: (k, 0)),   # w2 H-slab
                pl.BlockSpec((1, O_p), lambda i, k: (0, 0)),    # b2
            ],
            out_specs=pl.BlockSpec((TB, O_p), lambda i, k: (i, 0)),
            scratch_shapes=[pltpu.VMEM((TB, O_p), jnp.float32)],
            compiler_params=pltpu.CompilerParams(
                dimension_semantics=("parallel", "arbitrary"),
                vmem_limit_bytes=vmem_limit,
            ),
        )(x_p, w1_p, b1_p, w2_p, b2_p)

    return out_p[:B, :O]


def init_params(key, input_size, hidden_size, output_size):
    """Deterministic init mirroring torch.nn.Linear (uniform +-1/sqrt(fan_in)).

    Weights are returned already transposed to (in, out) layout; biases 1-D."""
    k1, k2, k3, k4 = jax.random.split(key, 4)
    bound1 = 1.0 / jnp.sqrt(jnp.float32(input_size))
    bound2 = 1.0 / jnp.sqrt(jnp.float32(hidden_size))
    w1 = jax.random.uniform(k1, (input_size, hidden_size), jnp.float32, -bound1, bound1)
    b1 = jax.random.uniform(k2, (hidden_size,), jnp.float32, -bound1, bound1)
    w2 = jax.random.uniform(k3, (hidden_size, output_size), jnp.float32, -bound2, bound2)
    b2 = jax.random.uniform(k4, (output_size,), jnp.float32, -bound2, bound2)
    return w1, b1, w2, b2


def mlp_reference(x, w1, b1, w2, b2):
    h = jnp.maximum(x @ w1 + b1[None, :], 0.0)
    y = h @ w2 + b2[None, :]
    return 0.7 + jax.nn.sigmoid(y) * 0.2


if __name__ == "__main__":
    # Small shapes consistent with the module: batch=8, input=32, hidden=64, out=16
    batch, input_size, hidden_size, output_size = 8, 32, 64, 16

    key = jax.random.PRNGKey(0)
    kx, kp = jax.random.split(key)
    x = jax.random.normal(kx, (batch, input_size), jnp.float32)
    w1, b1, w2, b2 = init_params(kp, input_size, hidden_size, output_size)

    params = prepare_params(w1, b1, w2, b2)      # one-time pad + bf16 cast
    out = jax.block_until_ready(mlp_forward(x, params))

    ref = mlp_reference(x, w1, b1, w2, b2)
    assert out.shape == (batch, output_size)
    assert jnp.allclose(out, ref, atol=2e-2, rtol=2e-2), (
        float(jnp.max(jnp.abs(out - ref))))

    # Also exercise the H-tiled accumulator path (chosen automatically when the
    # resident weights would not fit the VMEM budget, e.g. big H on v7x).
    hidden2, batch2 = 256, 20                    # multiple H tiles, ragged batch
    w1b, b1b, w2b, b2b = init_params(kp, input_size, hidden2, output_size)
    params2 = prepare_params(w1b, b1b, w2b, b2b)
    x2 = jax.random.normal(kx, (batch2, input_size), jnp.float32)
    out2 = jax.block_until_ready(
        mlp_forward(x2, params2, tile_h=128, force_h_tiled=True))
    ref2 = mlp_reference(x2, w1b, b1b, w2b, b2b)
    assert out2.shape == (batch2, output_size)
    assert jnp.allclose(out2, ref2, atol=2e-2, rtol=2e-2), (
        float(jnp.max(jnp.abs(out2 - ref2))))

    print("KERNEL_OK")
</pallas_src>

<mosaic_0001>
module attributes {stable_mosaic.version = 11 : i64} {
  func.func @mlp_kernel_fused(%arg0: i32, %arg1: memref<8x128xbf16, #tpu.memory_space<vmem>>, %arg2: memref<128x128xbf16, #tpu.memory_space<vmem>>, %arg3: memref<1x128xf32, #tpu.memory_space<vmem>>, %arg4: memref<128x128xbf16, #tpu.memory_space<vmem>>, %arg5: memref<1x128xf32, #tpu.memory_space<vmem>>, %arg6: memref<8x128xf32, #tpu.memory_space<vmem>>) attributes {dimension_semantics = [#tpu.dimension_semantics<parallel>], iteration_bounds = array<i64: 1>, scalar_prefetch = 0 : i64, scratch_operands = 0 : i64, tpu.core_type = #tpu.core_type<tc>, window_params = [{transform_indices = @transform_0, window_bounds = array<i64: 8, 128>}, {pipeline_mode = #tpu.pipeline_mode<synchronous>, transform_indices = @transform_1, window_bounds = array<i64: 128, 128>}, {pipeline_mode = #tpu.pipeline_mode<synchronous>, transform_indices = @transform_2, window_bounds = array<i64: 1, 128>}, {pipeline_mode = #tpu.pipeline_mode<synchronous>, transform_indices = @transform_3, window_bounds = array<i64: 128, 128>}, {pipeline_mode = #tpu.pipeline_mode<synchronous>, transform_indices = @transform_4, window_bounds = array<i64: 1, 128>}, {transform_indices = @transform_5, window_bounds = array<i64: 8, 128>}]} {
    %c0 = arith.constant 0 : index
    %c0_0 = arith.constant 0 : index
    %0 = vector.load %arg1[%c0, %c0_0] : memref<8x128xbf16, #tpu.memory_space<vmem>>, vector<8x128xbf16>
    %c0_1 = arith.constant 0 : index
    %c0_2 = arith.constant 0 : index
    %1 = vector.load %arg2[%c0_1, %c0_2] : memref<128x128xbf16, #tpu.memory_space<vmem>>, vector<128x128xbf16>
    %cst = arith.constant dense<0.000000e+00> : vector<8x128xf32>
    %2 = tpu.matmul %0, %1, %cst {dimension_numbers = #tpu.dot_dimension_numbers<[1], [0], [0], [1], [0, 0, 1, 1], [], []>} : vector<8x128xbf16>, vector<128x128xbf16>, vector<8x128xf32> -> vector<8x128xf32>
    %c0_3 = arith.constant 0 : index
    %c0_4 = arith.constant 0 : index
    %3 = vector.load %arg3[%c0_3, %c0_4] : memref<1x128xf32, #tpu.memory_space<vmem>>, vector<1x128xf32>
    %4 = vector.broadcast %3 : vector<1x128xf32> to vector<8x128xf32>
    %5 = arith.addf %2, %4 : vector<8x128xf32>
    %cst_5 = arith.constant 0.000000e+00 : f32
    %6 = vector.broadcast %cst_5 : f32 to vector<8x128xf32>
    %7 = arith.maximumf %5, %6 : vector<8x128xf32>
    %8 = arith.truncf %7 : vector<8x128xf32> to vector<8x128xbf16>
    %c0_6 = arith.constant 0 : index
    %c0_7 = arith.constant 0 : index
    %9 = vector.load %arg4[%c0_6, %c0_7] : memref<128x128xbf16, #tpu.memory_space<vmem>>, vector<128x128xbf16>
    %cst_8 = arith.constant dense<0.000000e+00> : vector<8x128xf32>
    %10 = tpu.matmul %8, %9, %cst_8 {dimension_numbers = #tpu.dot_dimension_numbers<[1], [0], [0], [1], [0, 0, 1, 1], [], []>} : vector<8x128xbf16>, vector<128x128xbf16>, vector<8x128xf32> -> vector<8x128xf32>
    %c0_9 = arith.constant 0 : index
    %c0_10 = arith.constant 0 : index
    %11 = vector.load %arg5[%c0_9, %c0_10] : memref<1x128xf32, #tpu.memory_space<vmem>>, vector<1x128xf32>
    %12 = vector.broadcast %11 : vector<1x128xf32> to vector<8x128xf32>
    %13 = arith.addf %10, %12 : vector<8x128xf32>
    %cst_11 = arith.constant 5.000000e-01 : f32
    %14 = vector.broadcast %cst_11 : f32 to vector<8x128xf32>
    %15 = arith.mulf %14, %13 : vector<8x128xf32>
    %16 = math.tanh %15 : vector<8x128xf32>
    %cst_12 = arith.constant 1.000000e-01 : f32
    %17 = vector.broadcast %cst_12 : f32 to vector<8x128xf32>
    %18 = arith.mulf %17, %16 : vector<8x128xf32>
    %cst_13 = arith.constant 8.000000e-01 : f32
    %19 = vector.broadcast %cst_13 : f32 to vector<8x128xf32>
    %20 = arith.addf %19, %18 : vector<8x128xf32>
    %c0_14 = arith.constant 0 : index
    %c0_15 = arith.constant 0 : index
    %21 = vector.load %arg6[%c0_14, %c0_15] : memref<8x128xf32, #tpu.memory_space<vmem>>, vector<8x128xf32>
    tpu.vector_store %arg6[%c0_14, %c0_15], %20 {strides = array<i32>} : memref<8x128xf32, #tpu.memory_space<vmem>>, vector<8x128xf32>,
    return
  }
  func.func @transform_0(%arg0: i32) -> (i32, i32) {
    %c0_i32 = arith.constant 0 : i32
    %c0_i32_0 = arith.constant 0 : i32
    return %arg0, %c0_i32 : i32, i32
  }
  func.func @transform_1(%arg0: i32) -> (i32, i32) {
    %c0_i32 = arith.constant 0 : i32
    %c0_i32_0 = arith.constant 0 : i32
    %c0_i32_1 = arith.constant 0 : i32
    return %c0_i32, %c0_i32_0 : i32, i32
  }
  func.func @transform_2(%arg0: i32) -> (i32, i32) {
    %c0_i32 = arith.constant 0 : i32
    %c0_i32_0 = arith.constant 0 : i32
    %c0_i32_1 = arith.constant 0 : i32
    return %c0_i32, %c0_i32_0 : i32, i32
  }
  func.func @transform_3(%arg0: i32) -> (i32, i32) {
    %c0_i32 = arith.constant 0 : i32
    %c0_i32_0 = arith.constant 0 : i32
    %c0_i32_1 = arith.constant 0 : i32
    return %c0_i32, %c0_i32_0 : i32, i32
  }
  func.func @transform_4(%arg0: i32) -> (i32, i32) {
    %c0_i32 = arith.constant 0 : i32
    %c0_i32_0 = arith.constant 0 : i32
    %c0_i32_1 = arith.constant 0 : i32
    return %c0_i32, %c0_i32_0 : i32, i32
  }
  func.func @transform_5(%arg0: i32) -> (i32, i32) {
    %c0_i32 = arith.constant 0 : i32
    %c0_i32_0 = arith.constant 0 : i32
    return %arg0, %c0_i32 : i32, i32
  }
}

module attributes {stable_mosaic.version = 11 : i64} {
  func.func @mlp_kernel_fused(%arg0: i32, %arg1: memref<8x128xbf16, #tpu.memory_space<vmem>>, %arg2: memref<128x128xbf16, #tpu.memory_space<vmem>>, %arg3: memref<1x128xf32, #tpu.memory_space<vmem>>, %arg4: memref<128x128xbf16, #tpu.memory_space<vmem>>, %arg5: memref<1x128xf32, #tpu.memory_space<vmem>>, %arg6: memref<8x128xf32, #tpu.memory_space<vmem>>) attributes {dimension_semantics = [#tpu.dimension_semantics<parallel>], iteration_bounds = array<i64: 1>, scalar_prefetch = 0 : i64, scratch_operands = 0 : i64, tpu.core_type = #tpu.core_type<tc>, window_params = [{transform_indices = @transform_0, window_bounds = array<i64: 8, 128>}, {pipeline_mode = #tpu.pipeline_mode<synchronous>, transform_indices = @transform_1, window_bounds = array<i64: 128, 128>}, {pipeline_mode = #tpu.pipeline_mode<synchronous>, transform_indices = @transform_2, window_bounds = array<i64: 1, 128>}, {pipeline_mode = #tpu.pipeline_mode<synchronous>, transform_indices = @transform_3, window_bounds = array<i64: 128, 128>}, {pipeline_mode = #tpu.pipeline_mode<synchronous>, transform_indices = @transform_4, window_bounds = array<i64: 1, 128>}, {transform_indices = @transform_5, window_bounds = array<i64: 8, 128>}]} {
    %c0 = arith.constant 0 : index
    %c0_0 = arith.constant 0 : index
    %0 = vector.load %arg1[%c0, %c0_0] : memref<8x128xbf16, #tpu.memory_space<vmem>>, vector<8x128xbf16>
    %c0_1 = arith.constant 0 : index
    %c0_2 = arith.constant 0 : index
    %1 = vector.load %arg2[%c0_1, %c0_2] : memref<128x128xbf16, #tpu.memory_space<vmem>>, vector<128x128xbf16>
    %cst = arith.constant dense<0.000000e+00> : vector<8x128xf32>
    %2 = tpu.matmul %0, %1, %cst {dimension_numbers = #tpu.dot_dimension_numbers<[1], [0], [0], [1], [0, 0, 1, 1], [], []>} : vector<8x128xbf16>, vector<128x128xbf16>, vector<8x128xf32> -> vector<8x128xf32>
    %c0_3 = arith.constant 0 : index
    %c0_4 = arith.constant 0 : index
    %3 = vector.load %arg3[%c0_3, %c0_4] : memref<1x128xf32, #tpu.memory_space<vmem>>, vector<1x128xf32>
    %4 = vector.broadcast %3 : vector<1x128xf32> to vector<8x128xf32>
    %5 = arith.addf %2, %4 : vector<8x128xf32>
    %cst_5 = arith.constant 0.000000e+00 : f32
    %6 = vector.broadcast %cst_5 : f32 to vector<8x128xf32>
    %7 = arith.maximumf %5, %6 : vector<8x128xf32>
    %8 = arith.truncf %7 : vector<8x128xf32> to vector<8x128xbf16>
    %c0_6 = arith.constant 0 : index
    %c0_7 = arith.constant 0 : index
    %9 = vector.load %arg4[%c0_6, %c0_7] : memref<128x128xbf16, #tpu.memory_space<vmem>>, vector<128x128xbf16>
    %cst_8 = arith.constant dense<0.000000e+00> : vector<8x128xf32>
    %10 = tpu.matmul %8, %9, %cst_8 {dimension_numbers = #tpu.dot_dimension_numbers<[1], [0], [0], [1], [0, 0, 1, 1], [], []>} : vector<8x128xbf16>, vector<128x128xbf16>, vector<8x128xf32> -> vector<8x128xf32>
    %c0_9 = arith.constant 0 : index
    %c0_10 = arith.constant 0 : index
    %11 = vector.load %arg5[%c0_9, %c0_10] : memref<1x128xf32, #tpu.memory_space<vmem>>, vector<1x128xf32>
    %12 = vector.broadcast %11 : vector<1x128xf32> to vector<8x128xf32>
    %13 = arith.addf %10, %12 : vector<8x128xf32>
    %cst_11 = arith.constant 5.000000e-01 : f32
    %14 = vector.broadcast %cst_11 : f32 to vector<8x128xf32>
    %15 = arith.mulf %14, %13 : vector<8x128xf32>
    %16 = math.tanh %15 : vector<8x128xf32>
    %cst_12 = arith.constant 1.000000e-01 : f32
    %17 = vector.broadcast %cst_12 : f32 to vector<8x128xf32>
    %18 = arith.mulf %17, %16 : vector<8x128xf32>
    %cst_13 = arith.constant 8.000000e-01 : f32
    %19 = vector.broadcast %cst_13 : f32 to vector<8x128xf32>
    %20 = arith.addf %19, %18 : vector<8x128xf32>
    %c0_14 = arith.constant 0 : index
    %c0_15 = arith.constant 0 : index
    %21 = vector.load %arg6[%c0_14, %c0_15] : memref<8x128xf32, #tpu.memory_space<vmem>>, vector<8x128xf32>
    tpu.vector_store %arg6[%c0_14, %c0_15], %20 {strides = array<i32>} : memref<8x128xf32, #tpu.memory_space<vmem>>, vector<8x128xf32>,
    return
  }
  func.func @transform_0(%arg0: i32) -> (i32, i32) {
    %c0_i32 = arith.constant 0 : i32
    %c0_i32_0 = arith.constant 0 : i32
    return %arg0, %c0_i32 : i32, i32
  }
  func.func @transform_1(%arg0: i32) -> (i32, i32) {
    %c0_i32 = arith.constant 0 : i32
    %c0_i32_0 = arith.constant 0 : i32
    %c0_i32_1 = arith.constant 0 : i32
    return %c0_i32, %c0_i32_0 : i32, i32
  }
  func.func @transform_2(%arg0: i32) -> (i32, i32) {
    %c0_i32 = arith.constant 0 : i32
    %c0_i32_0 = arith.constant 0 : i32
    %c0_i32_1 = arith.constant 0 : i32
    return %c0_i32, %c0_i32_0 : i32, i32
  }
  func.func @transform_3(%arg0: i32) -> (i32, i32) {
    %c0_i32 = arith.constant 0 : i32
    %c0_i32_0 = arith.constant 0 : i32
    %c0_i32_1 = arith.constant 0 : i32
    return %c0_i32, %c0_i32_0 : i32, i32
  }
  func.func @transform_4(%arg0: i32) -> (i32, i32) {
    %c0_i32 = arith.constant 0 : i32
    %c0_i32_0 = arith.constant 0 : i32
    %c0_i32_1 = arith.constant 0 : i32
    return %c0_i32, %c0_i32_0 : i32, i32
  }
  func.func @transform_5(%arg0: i32) -> (i32, i32) {
    %c0_i32 = arith.constant 0 : i32
    %c0_i32_0 = arith.constant 0 : i32
    return %arg0, %c0_i32 : i32, i32
  }
}

</mosaic_0001>

<llo_original>
// kernel: tpu_custom_call.1
$region0: #{tpu_custom_call.1}
  #allocation0 [shape = 'u32[]', space=smem, size = 0x4, offset = 0x4, fixed_abs, tag = 'smem constant byte address 0x4 - core index']
  #allocation1 [shape = 'u32[144,128]{1,0:T(1,128)}', space=vmem, size = 0x12000, scoped, tag = 'internal scratch']
  %s0 = inlined_call_operand.hbm [shape: bf16[8,128], index: 0, kind: input, shape index: {}]
  %s1 = inlined_call_operand.hbm [shape: bf16[128,128], index: 1, kind: input, shape index: {}]
  %s2 = inlined_call_operand.vmem [shape: f32[1,128], index: 2, kind: input, shape index: {}]
  %s3 = inlined_call_operand.hbm [shape: bf16[128,128], index: 3, kind: input, shape index: {}]
  %s4 = inlined_call_operand.vmem [shape: f32[1,128], index: 4, kind: input, shape index: {}]
  %s5 = inlined_call_operand.hbm [shape: f32[8,128], index: 5, kind: output, shape index: {}]
  %s6 = sld [smem:[#allocation0]]
  $region42: #{tpu_custom_call.1} parent=0
    _
  %s8 = ssub.s32 1, %s6
  %s9 = scalar_select 0, %s8, %s6
  $region1: #{tpu_custom_call.1} parent=0
    #allocation2 [shape = 'u8[2048]{0}', space=vmem, size = 0x800, scoped, tag = 'input window, operand 0, single buffered']
    #allocation3 [shape = 's32[1]{0}', space=sflag, size = 0x4, scoped, tag = 'scoped memory for tpu_custom_call.1']
    #allocation4 [shape = 's32[1]{0}', space=sflag, size = 0x4, scoped, tag = 'scoped memory for tpu_custom_call.1']
    #allocation5 [shape = 'u8[32768]{0}', space=vmem, size = 0x8000, scoped, tag = 'input window, operand 1, single buffered']
    #allocation6 [shape = 's32[1]{0}', space=sflag, size = 0x4, scoped, tag = 'scoped memory for tpu_custom_call.1']
    #allocation7 [shape = 'u8[32768]{0}', space=vmem, size = 0x8000, scoped, tag = 'input window, operand 3, single buffered']
    #allocation8 [shape = 'u8[4096]{0}', space=vmem, size = 0x1000, scoped, tag = 'output window, operand 0, single buffered']
    %10 = vsyncpa [#allocation3], 0
    %11 = vsyncpa [#allocation6], 0
    %12 = vsyncpa [#allocation4], 0
    // Predicated region
    $region2: #{tpu_custom_call.1} parent=1 // pred_check
      _
    $region3: #{tpu_custom_call.1} parent=1 // pred_check_branch
      %14 = sbr.rel (0) target = $region5
    $region4: #{tpu_custom_call.1} parent=1 // pred_region
      %s16 = ssub.s32 64, 64
      %17 = vsyncadd [#allocation3], %s16
      %s19 = sshll.u32 [#allocation2], 4
      %s20 = int_to_ptr.vmem [resolvable:$true] %s19
      %22 = dma.hbm_to_vmem [thread:$0]  %s0, 64, %s20, [#allocation3]
    $region5: #{tpu_custom_call.1} parent=1 // pred_fallthru
      _
    // Predicated region
    $region6: #{tpu_custom_call.1} parent=1 // pred_check
      _
    $region7: #{tpu_custom_call.1} parent=1 // pred_check_branch
      %24 = sbr.rel (0) target = $region9
    $region8: #{tpu_custom_call.1} parent=1 // pred_region
      %s26 = ssub.s32 1024, 1024
      %27 = vsyncadd [#allocation6], %s26
      %s28 = sshll.u32 [#allocation5], 4
      %s29 = int_to_ptr.vmem [resolvable:$true] %s28
      %34 = dma.hbm_to_vmem [thread:$0]  %s1, 1024, %s29, [#allocation6], 64, 64, 4
    $region9: #{tpu_custom_call.1} parent=1 // pred_fallthru
      _
    // Predicated region
    $region10: #{tpu_custom_call.1} parent=1 // pred_check
      _
    $region11: #{tpu_custom_call.1} parent=1 // pred_check_branch
      %36 = sbr.rel (0) target = $region13
    $region12: #{tpu_custom_call.1} parent=1 // pred_region
      _
    $region13: #{tpu_custom_call.1} parent=1 // pred_fallthru
      _
    // Predicated region
    $region14: #{tpu_custom_call.1} parent=1 // pred_check
      _
    $region15: #{tpu_custom_call.1} parent=1 // pred_check_branch
      %38 = sbr.rel (0) target = $region17
    $region16: #{tpu_custom_call.1} parent=1 // pred_region
      %s40 = ssub.s32 1024, 1024
      %41 = vsyncadd [#allocation6], %s40
      %s42 = sshll.u32 [#allocation7], 4
      %s43 = int_to_ptr.vmem [resolvable:$true] %s42
      %48 = dma.hbm_to_vmem [thread:$0]  %s3, 1024, %s43, [#allocation6], 64, 64, 4
    $region17: #{tpu_custom_call.1} parent=1 // pred_fallthru
      _
    // Predicated region
    $region18: #{tpu_custom_call.1} parent=1 // pred_check
      _
    $region19: #{tpu_custom_call.1} parent=1 // pred_check_branch
      %50 = sbr.rel (0) target = $region21
    $region20: #{tpu_custom_call.1} parent=1 // pred_region
      _
    $region21: #{tpu_custom_call.1} parent=1 // pred_fallthru
      _
    // Predicated region
    $region22: #{tpu_custom_call.1} parent=1 // pred_check
      _
    $region23: #{tpu_custom_call.1} parent=1 // pred_check_branch
      %52 = sbr.rel (0) target = $region25
    $region24: #{tpu_custom_call.1} parent=1 // pred_region
      %53 = dma.done [#allocation3], 64
    $region25: #{tpu_custom_call.1} parent=1 // pred_fallthru
      _
    // Predicated region
    $region26: #{tpu_custom_call.1} parent=1 // pred_check
      _
    $region27: #{tpu_custom_call.1} parent=1 // pred_check_branch
      %55 = sbr.rel (0) target = $region29
    $region28: #{tpu_custom_call.1} parent=1 // pred_region
      %56 = dma.done [#allocation6], 1024
    $region29: #{tpu_custom_call.1} parent=1 // pred_fallthru
      _
    // Predicated region
    $region30: #{tpu_custom_call.1} parent=1 // pred_check
      _
    $region31: #{tpu_custom_call.1} parent=1 // pred_check_branch
      %58 = sbr.rel (0) target = $region33
    $region32: #{tpu_custom_call.1} parent=1 // pred_region
      %59 = dma.done [#allocation6], 1024
    $region33: #{tpu_custom_call.1} parent=1 // pred_fallthru
      _
    %v61 = vld [vmem:[#allocation2] sm:$0xf]
    %v62 = vld [vmem:[#allocation5] sm:$0xf]
    %v63 = vld [vmem:[#allocation5 + $0x4] sm:$0xf]
    %v64 = vld [vmem:[#allocation5 + $0x8] sm:$0xf]
    %v65 = vld [vmem:[#allocation5 + $0xc] sm:$0xf]
    %v66 = vld [vmem:[#allocation5 + $0x10] sm:$0xf]
    %v67 = vld [vmem:[#allocation5 + $0x14] sm:$0xf]
    %v68 = vld [vmem:[#allocation5 + $0x18] sm:$0xf]
    %v69 = vld [vmem:[#allocation5 + $0x1c] sm:$0xf]
    %v70 = vld [vmem:[#allocation5 + $0x20] sm:$0xf]
    %v71 = vld [vmem:[#allocation5 + $0x24] sm:$0xf]
    %v72 = vld [vmem:[#allocation5 + $0x28] sm:$0xf]
    %v73 = vld [vmem:[#allocation5 + $0x2c] sm:$0xf]
    %v74 = vld [vmem:[#allocation5 + $0x30] sm:$0xf]
    %v75 = vld [vmem:[#allocation5 + $0x34] sm:$0xf]
    %v76 = vld [vmem:[#allocation5 + $0x38] sm:$0xf]
    %v77 = vld [vmem:[#allocation5 + $0x3c] sm:$0xf]
    %v78 = vld [vmem:[%s2] sm:$0x1]
    %v80 = vlaneseq
    %v81 = vshrl.u32 %v80, 7
    %v82 = vsub.s32 0, %v81
    %v83 = vrot.slane %v78, %v82
    %v101 = vunpack.c.l.b16 %v62
    %v102 = vunpack.c.l.b16 %v63
    %v103 = vunpack.c.l.b16 %v64
    %v104 = vunpack.c.l.b16 %v65
    %v105 = vunpack.c.l.b16 %v66
    %v106 = vunpack.c.l.b16 %v67
    %v107 = vunpack.c.l.b16 %v68
    %v108 = vunpack.c.l.b16 %v69
    %v109 = vunpack.c.l.b16 %v70
    %v110 = vunpack.c.l.b16 %v71
    %v111 = vunpack.c.l.b16 %v72
    %v112 = vunpack.c.l.b16 %v73
    %v113 = vunpack.c.l.b16 %v74
    %v114 = vunpack.c.l.b16 %v75
    %v115 = vunpack.c.l.b16 %v76
    %v116 = vunpack.c.l.b16 %v77
    %v117 = vpack.c.b16 %v102, %v101
    %v118 = vpack.c.b16 %v104, %v103
    %v119 = vpack.c.b16 %v106, %v105
    %v120 = vpack.c.b16 %v108, %v107
    %v121 = vpack.c.b16 %v110, %v109
    %v122 = vpack.c.b16 %v112, %v111
    %v123 = vpack.c.b16 %v114, %v113
    %v124 = vpack.c.b16 %v116, %v115
    %133 = vmatprep.subr.bf16.mxu0 0
    %134 = vmatpush1.bf16.msra.mxu0 %v124
    %135 = vmatprep.subr.bf16.mxu0 0
    %136 = vmatpush1.bf16.msra.mxu0 %v123
    %137 = vmatprep.subr.bf16.mxu0 0
    %138 = vmatpush1.bf16.msra.mxu0 %v122
    %139 = vmatprep.subr.bf16.mxu0 0
    %140 = vmatpush1.bf16.msra.mxu0 %v121
    %141 = vmatprep.subr.bf16.mxu0 0
    %142 = vmatpush1.bf16.msra.mxu0 %v120
    %143 = vmatprep.subr.bf16.mxu0 0
    %144 = vmatpush1.bf16.msra.mxu0 %v119
    %145 = vmatprep.subr.bf16.mxu0 0
    %146 = vmatpush1.bf16.msra.mxu0 %v118
    %147 = vmatprep.subr.bf16.mxu0 0
    %148 = vmatpush1.bf16.msra.mxu0 %v117
    %149 = vmatprep.subr.bf16.mxu0 0
    %150 = vmatpush2.bf16.msra.mxu0 0
    %151 = vmatprep.subr.bf16.mxu0 0
    %152 = vmatpush2.bf16.msra.mxu0 0
    %153 = vmatprep.subr.bf16.mxu0 0
    %154 = vmatpush2.bf16.msra.mxu0 0
    %155 = vmatprep.subr.bf16.mxu0 0
    %156 = vmatpush2.bf16.msra.mxu0 0
    %157 = vmatprep.subr.bf16.mxu0 0
    %158 = vmatpush2.bf16.msra.mxu0 0
    %159 = vmatprep.subr.bf16.mxu0 0
    %160 = vmatpush2.bf16.msra.mxu0 0
    %161 = vmatprep.subr.bf16.mxu0 0
    %162 = vmatpush2.bf16.msra.mxu0 0
    %163 = vmatprep.subr.bf16.mxu0 0
    %164 = vmatpush2.bf16.msra.mxu0 0
    %165 = vmatprep.mubr.bf16.mxu0 0
    %166 = vmatmul.mubr.bf16.gmra.mxu0 %v61
    %v167 = vpop.f32.mrf.mxu0
    %v168 = vadd.f32 %v83, %v167
    %v169 = vpop.f32.mrf.mxu0
    %v170 = vpop.f32.mrf.mxu0
    %v171 = vpop.f32.mrf.mxu0
    %172 = vdwg.mxu0
    %v173 = vmax.f32 %v168, 0.0
    %v174 = vpack.c.bf16 %v173, %v173
    %v175 = vld [vmem:[#allocation7] sm:$0xf]
    %v176 = vld [vmem:[#allocation7 + $0x4] sm:$0xf]
    %v177 = vld [vmem:[#allocation7 + $0x8] sm:$0xf]
    %v178 = vld [vmem:[#allocation7 + $0xc] sm:$0xf]
    %v179 = vld [vmem:[#allocation7 + $0x10] sm:$0xf]
    %v180 = vld [vmem:[#allocation7 + $0x14] sm:$0xf]
    %v181 = vld [vmem:[#allocation7 + $0x18] sm:$0xf]
    %v182 = vld [vmem:[#allocation7 + $0x1c] sm:$0xf]
    %v183 = vld [vmem:[#allocation7 + $0x20] sm:$0xf]
    %v184 = vld [vmem:[#allocation7 + $0x24] sm:$0xf]
    %v185 = vld [vmem:[#allocation7 + $0x28] sm:$0xf]
    %v186 = vld [vmem:[#allocation7 + $0x2c] sm:$0xf]
    %v187 = vld [vmem:[#allocation7 + $0x30] sm:$0xf]
    %v188 = vld [vmem:[#allocation7 + $0x34] sm:$0xf]
    %v189 = vld [vmem:[#allocation7 + $0x38] sm:$0xf]
    %v190 = vld [vmem:[#allocation7 + $0x3c] sm:$0xf]
    %v191 = vld [vmem:[%s4] sm:$0x1]
    %v193 = vlaneseq
    %v194 = vshrl.u32 %v193, 7
    %v195 = vsub.s32 0, %v194
    %v196 = vrot.slane %v191, %v195
    %v214 = vunpack.c.l.b16 %v175
    %v215 = vunpack.c.l.b16 %v176
    %v216 = vunpack.c.l.b16 %v177
    %v217 = vunpack.c.l.b16 %v178
    %v218 = vunpack.c.l.b16 %v179
    %v219 = vunpack.c.l.b16 %v180
    %v220 = vunpack.c.l.b16 %v181
    %v221 = vunpack.c.l.b16 %v182
    %v222 = vunpack.c.l.b16 %v183
    %v223 = vunpack.c.l.b16 %v184
    %v224 = vunpack.c.l.b16 %v185
    %v225 = vunpack.c.l.b16 %v186
    %v226 = vunpack.c.l.b16 %v187
    %v227 = vunpack.c.l.b16 %v188
    %v228 = vunpack.c.l.b16 %v189
    %v229 = vunpack.c.l.b16 %v190
    %v230 = vpack.c.b16 %v215, %v214
    %v231 = vpack.c.b16 %v217, %v216
    %v232 = vpack.c.b16 %v219, %v218
    %v233 = vpack.c.b16 %v221, %v220
    %v234 = vpack.c.b16 %v223, %v222
    %v235 = vpack.c.b16 %v225, %v224
    %v236 = vpack.c.b16 %v227, %v226
    %v237 = vpack.c.b16 %v229, %v228
    %246 = vmatprep.subr.bf16.mxu0 0
    %247 = vmatpush1.bf16.msra.mxu0 %v237
    %248 = vmatprep.subr.bf16.mxu0 0
    %249 = vmatpush1.bf16.msra.mxu0 %v236
    %250 = vmatprep.subr.bf16.mxu0 0
    %251 = vmatpush1.bf16.msra.mxu0 %v235
    %252 = vmatprep.subr.bf16.mxu0 0
    %253 = vmatpush1.bf16.msra.mxu0 %v234
    %254 = vmatprep.subr.bf16.mxu0 0
    %255 = vmatpush1.bf16.msra.mxu0 %v233
    %256 = vmatprep.subr.bf16.mxu0 0
    %257 = vmatpush1.bf16.msra.mxu0 %v232
    %258 = vmatprep.subr.bf16.mxu0 0
    %259 = vmatpush1.bf16.msra.mxu0 %v231
    %260 = vmatprep.subr.bf16.mxu0 0
    %261 = vmatpush1.bf16.msra.mxu0 %v230
    %262 = vmatprep.subr.bf16.mxu0 0
    %263 = vmatpush2.bf16.msra.mxu0 0
    %264 = vmatprep.subr.bf16.mxu0 0
    %265 = vmatpush2.bf16.msra.mxu0 0
    %266 = vmatprep.subr.bf16.mxu0 0
    %267 = vmatpush2.bf16.msra.mxu0 0
    %268 = vmatprep.subr.bf16.mxu0 0
    %269 = vmatpush2.bf16.msra.mxu0 0
    %270 = vmatprep.subr.bf16.mxu0 0
    %271 = vmatpush2.bf16.msra.mxu0 0
    %272 = vmatprep.subr.bf16.mxu0 0
    %273 = vmatpush2.bf16.msra.mxu0 0
    %274 = vmatprep.subr.bf16.mxu0 0
    %275 = vmatpush2.bf16.msra.mxu0 0
    %276 = vmatprep.subr.bf16.mxu0 0
    %277 = vmatpush2.bf16.msra.mxu0 0
    %278 = vmatprep.mubr.bf16.mxu0 0
    %279 = vmatmul.mubr.bf16.gmra.mxu0 %v174
    %v280 = vpop.f32.mrf.mxu0
    %v281 = vadd.f32 %v196, %v280
    %v282 = vpop.f32.mrf.mxu0
    %v283 = vpop.f32.mrf.mxu0
    %v284 = vpop.f32.mrf.mxu0
    %285 = vdwg.mxu0
    %v286 = vmul.f32 %v281, 0.5
    %v287 = vtanh.pop %v286
    %v288 = vmul.f32 %v287, 0.1
    %v289 = vadd.f32 %v288, 0.8
    %290 = vst [vmem:[#allocation8] sm:$0xff] %v289
    // Predicated region
    $region34: #{tpu_custom_call.1} parent=1 // pred_check
      _
    $region35: #{tpu_custom_call.1} parent=1 // pred_check_branch
      %292 = sbr.rel (0) target = $region37
    $region36: #{tpu_custom_call.1} parent=1 // pred_region
      %s294 = ssub.s32 128, 128
      %295 = vsyncadd [#allocation4], %s294
      %s297 = sshll.u32 [#allocation8], 4
      %s298 = int_to_ptr.vmem [resolvable:$true] %s297
      %300 = dma.vmem_to_hbm [thread:$0]  %s298, 128, %s5, [#allocation4]
    $region37: #{tpu_custom_call.1} parent=1 // pred_fallthru
      _
    // Predicated region
    $region38: #{tpu_custom_call.1} parent=1 // pred_check
      _
    $region39: #{tpu_custom_call.1} parent=1 // pred_check_branch
      %302 = sbr.rel (0) target = $region41
    $region40: #{tpu_custom_call.1} parent=1 // pred_region
      %303 = dma.done [#allocation4], 128
    $region41: #{tpu_custom_call.1} parent=1 // pred_fallthru
      _
    %304 = vsyncpa [#allocation3], 1
    %305 = vsyncpa [#allocation6], 1
    %306 = vsyncpa [#allocation4], 1

// kernel: tpu_custom_call.1
$region0: #{tpu_custom_call.1}
  #allocation0 [shape = 'u32[]', space=smem, size = 0x4, offset = 0x4, fixed_abs, tag = 'smem constant byte address 0x4 - core index']
  #allocation1 [shape = 'u32[144,128]{1,0:T(1,128)}', space=vmem, size = 0x12000, scoped, tag = 'internal scratch']
  %s0 = inlined_call_operand.hbm [shape: bf16[8,128], index: 0, kind: input, shape index: {}]
  %s1 = inlined_call_operand.hbm [shape: bf16[128,128], index: 1, kind: input, shape index: {}]
  %s2 = inlined_call_operand.vmem [shape: f32[1,128], index: 2, kind: input, shape index: {}]
  %s3 = inlined_call_operand.hbm [shape: bf16[128,128], index: 3, kind: input, shape index: {}]
  %s4 = inlined_call_operand.vmem [shape: f32[1,128], index: 4, kind: input, shape index: {}]
  %s5 = inlined_call_operand.hbm [shape: f32[8,128], index: 5, kind: output, shape index: {}]
  %s6 = sld [smem:[#allocation0]]
  $region42: #{tpu_custom_call.1} parent=0
    _
  %s8 = ssub.s32 1, %s6
  %s9 = scalar_select 0, %s8, %s6
  $region1: #{tpu_custom_call.1} parent=0
    #allocation2 [shape = 'u8[2048]{0}', space=vmem, size = 0x800, scoped, tag = 'input window, operand 0, single buffered']
    #allocation3 [shape = 's32[1]{0}', space=sflag, size = 0x4, scoped, tag = 'scoped memory for tpu_custom_call.1']
    #allocation4 [shape = 's32[1]{0}', space=sflag, size = 0x4, scoped, tag = 'scoped memory for tpu_custom_call.1']
    #allocation5 [shape = 'u8[32768]{0}', space=vmem, size = 0x8000, scoped, tag = 'input window, operand 1, single buffered']
    #allocation6 [shape = 's32[1]{0}', space=sflag, size = 0x4, scoped, tag = 'scoped memory for tpu_custom_call.1']
    #allocation7 [shape = 'u8[32768]{0}', space=vmem, size = 0x8000, scoped, tag = 'input window, operand 3, single buffered']
    #allocation8 [shape = 'u8[4096]{0}', space=vmem, size = 0x1000, scoped, tag = 'output window, operand 0, single buffered']
    %10 = vsyncpa [#allocation3], 0
    %11 = vsyncpa [#allocation6], 0
    %12 = vsyncpa [#allocation4], 0
    // Predicated region
    $region2: #{tpu_custom_call.1} parent=1 // pred_check
      _
    $region3: #{tpu_custom_call.1} parent=1 // pred_check_branch
      %14 = sbr.rel (0) target = $region5
    $region4: #{tpu_custom_call.1} parent=1 // pred_region
      %s16 = ssub.s32 64, 64
      %17 = vsyncadd [#allocation3], %s16
      %s19 = sshll.u32 [#allocation2], 4
      %s20 = int_to_ptr.vmem [resolvable:$true] %s19
      %22 = dma.hbm_to_vmem [thread:$0]  %s0, 64, %s20, [#allocation3]
    $region5: #{tpu_custom_call.1} parent=1 // pred_fallthru
      _
    // Predicated region
    $region6: #{tpu_custom_call.1} parent=1 // pred_check
      _
    $region7: #{tpu_custom_call.1} parent=1 // pred_check_branch
      %24 = sbr.rel (0) target = $region9
    $region8: #{tpu_custom_call.1} parent=1 // pred_region
      %s26 = ssub.s32 1024, 1024
      %27 = vsyncadd [#allocation6], %s26
      %s28 = sshll.u32 [#allocation5], 4
      %s29 = int_to_ptr.vmem [resolvable:$true] %s28
      %34 = dma.hbm_to_vmem [thread:$0]  %s1, 1024, %s29, [#allocation6], 64, 64, 4
    $region9: #{tpu_custom_call.1} parent=1 // pred_fallthru
      _
    // Predicated region
    $region10: #{tpu_custom_call.1} parent=1 // pred_check
      _
    $region11: #{tpu_custom_call.1} parent=1 // pred_check_branch
      %36 = sbr.rel (0) target = $region13
    $region12: #{tpu_custom_call.1} parent=1 // pred_region
      _
    $region13: #{tpu_custom_call.1} parent=1 // pred_fallthru
      _
    // Predicated region
    $region14: #{tpu_custom_call.1} parent=1 // pred_check
      _
    $region15: #{tpu_custom_call.1} parent=1 // pred_check_branch
      %38 = sbr.rel (0) target = $region17
    $region16: #{tpu_custom_call.1} parent=1 // pred_region
      %s40 = ssub.s32 1024, 1024
      %41 = vsyncadd [#allocation6], %s40
      %s42 = sshll.u32 [#allocation7], 4
      %s43 = int_to_ptr.vmem [resolvable:$true] %s42
      %48 = dma.hbm_to_vmem [thread:$0]  %s3, 1024, %s43, [#allocation6], 64, 64, 4
    $region17: #{tpu_custom_call.1} parent=1 // pred_fallthru
      _
    // Predicated region
    $region18: #{tpu_custom_call.1} parent=1 // pred_check
      _
    $region19: #{tpu_custom_call.1} parent=1 // pred_check_branch
      %50 = sbr.rel (0) target = $region21
    $region20: #{tpu_custom_call.1} parent=1 // pred_region
      _
    $region21: #{tpu_custom_call.1} parent=1 // pred_fallthru
      _
    // Predicated region
    $region22: #{tpu_custom_call.1} parent=1 // pred_check
      _
    $region23: #{tpu_custom_call.1} parent=1 // pred_check_branch
      %52 = sbr.rel (0) target = $region25
    $region24: #{tpu_custom_call.1} parent=1 // pred_region
      %53 = dma.done [#allocation3], 64
    $region25: #{tpu_custom_call.1} parent=1 // pred_fallthru
      _
    // Predicated region
    $region26: #{tpu_custom_call.1} parent=1 // pred_check
      _
    $region27: #{tpu_custom_call.1} parent=1 // pred_check_branch
      %55 = sbr.rel (0) target = $region29
    $region28: #{tpu_custom_call.1} parent=1 // pred_region
      %56 = dma.done [#allocation6], 1024
    $region29: #{tpu_custom_call.1} parent=1 // pred_fallthru
      _
    // Predicated region
    $region30: #{tpu_custom_call.1} parent=1 // pred_check
      _
    $region31: #{tpu_custom_call.1} parent=1 // pred_check_branch
      %58 = sbr.rel (0) target = $region33
    $region32: #{tpu_custom_call.1} parent=1 // pred_region
      %59 = dma.done [#allocation6], 1024
    $region33: #{tpu_custom_call.1} parent=1 // pred_fallthru
      _
    %v61 = vld [vmem:[#allocation2] sm:$0xf]
    %v62 = vld [vmem:[#allocation5] sm:$0xf]
    %v63 = vld [vmem:[#allocation5 + $0x4] sm:$0xf]
    %v64 = vld [vmem:[#allocation5 + $0x8] sm:$0xf]
    %v65 = vld [vmem:[#allocation5 + $0xc] sm:$0xf]
    %v66 = vld [vmem:[#allocation5 + $0x10] sm:$0xf]
    %v67 = vld [vmem:[#allocation5 + $0x14] sm:$0xf]
    %v68 = vld [vmem:[#allocation5 + $0x18] sm:$0xf]
    %v69 = vld [vmem:[#allocation5 + $0x1c] sm:$0xf]
    %v70 = vld [vmem:[#allocation5 + $0x20] sm:$0xf]
    %v71 = vld [vmem:[#allocation5 + $0x24] sm:$0xf]
    %v72 = vld [vmem:[#allocation5 + $0x28] sm:$0xf]
    %v73 = vld [vmem:[#allocation5 + $0x2c] sm:$0xf]
    %v74 = vld [vmem:[#allocation5 + $0x30] sm:$0xf]
    %v75 = vld [vmem:[#allocation5 + $0x34] sm:$0xf]
    %v76 = vld [vmem:[#allocation5 + $0x38] sm:$0xf]
    %v77 = vld [vmem:[#allocation5 + $0x3c] sm:$0xf]
    %v78 = vld [vmem:[%s2] sm:$0x1]
    %v80 = vlaneseq
    %v81 = vshrl.u32 %v80, 7
    %v82 = vsub.s32 0, %v81
    %v83 = vrot.slane %v78, %v82
    %v101 = vunpack.c.l.b16 %v62
    %v102 = vunpack.c.l.b16 %v63
    %v103 = vunpack.c.l.b16 %v64
    %v104 = vunpack.c.l.b16 %v65
    %v105 = vunpack.c.l.b16 %v66
    %v106 = vunpack.c.l.b16 %v67
    %v107 = vunpack.c.l.b16 %v68
    %v108 = vunpack.c.l.b16 %v69
    %v109 = vunpack.c.l.b16 %v70
    %v110 = vunpack.c.l.b16 %v71
    %v111 = vunpack.c.l.b16 %v72
    %v112 = vunpack.c.l.b16 %v73
    %v113 = vunpack.c.l.b16 %v74
    %v114 = vunpack.c.l.b16 %v75
    %v115 = vunpack.c.l.b16 %v76
    %v116 = vunpack.c.l.b16 %v77
    %v117 = vpack.c.b16 %v102, %v101
    %v118 = vpack.c.b16 %v104, %v103
    %v119 = vpack.c.b16 %v106, %v105
    %v120 = vpack.c.b16 %v108, %v107
    %v121 = vpack.c.b16 %v110, %v109
    %v122 = vpack.c.b16 %v112, %v111
    %v123 = vpack.c.b16 %v114, %v113
    %v124 = vpack.c.b16 %v116, %v115
    %133 = vmatprep.subr.bf16.mxu0 0
    %134 = vmatpush1.bf16.msra.mxu0 %v124
    %135 = vmatprep.subr.bf16.mxu0 0
    %136 = vmatpush1.bf16.msra.mxu0 %v123
    %137 = vmatprep.subr.bf16.mxu0 0
    %138 = vmatpush1.bf16.msra.mxu0 %v122
    %139 = vmatprep.subr.bf16.mxu0 0
    %140 = vmatpush1.bf16.msra.mxu0 %v121
    %141 = vmatprep.subr.bf16.mxu0 0
    %142 = vmatpush1.bf16.msra.mxu0 %v120
    %143 = vmatprep.subr.bf16.mxu0 0
    %144 = vmatpush1.bf16.msra.mxu0 %v119
    %145 = vmatprep.subr.bf16.mxu0 0
    %146 = vmatpush1.bf16.msra.mxu0 %v118
    %147 = vmatprep.subr.bf16.mxu0 0
    %148 = vmatpush1.bf16.msra.mxu0 %v117
    %149 = vmatprep.subr.bf16.mxu0 0
    %150 = vmatpush2.bf16.msra.mxu0 0
    %151 = vmatprep.subr.bf16.mxu0 0
    %152 = vmatpush2.bf16.msra.mxu0 0
    %153 = vmatprep.subr.bf16.mxu0 0
    %154 = vmatpush2.bf16.msra.mxu0 0
    %155 = vmatprep.subr.bf16.mxu0 0
    %156 = vmatpush2.bf16.msra.mxu0 0
    %157 = vmatprep.subr.bf16.mxu0 0
    %158 = vmatpush2.bf16.msra.mxu0 0
    %159 = vmatprep.subr.bf16.mxu0 0
    %160 = vmatpush2.bf16.msra.mxu0 0
    %161 = vmatprep.subr.bf16.mxu0 0
    %162 = vmatpush2.bf16.msra.mxu0 0
    %163 = vmatprep.subr.bf16.mxu0 0
    %164 = vmatpush2.bf16.msra.mxu0 0
    %165 = vmatprep.mubr.bf16.mxu0 0
    %166 = vmatmul.mubr.bf16.gmra.mxu0 %v61
    %v167 = vpop.f32.mrf.mxu0
    %v168 = vadd.f32 %v83, %v167
    %v169 = vpop.f32.mrf.mxu0
    %v170 = vpop.f32.mrf.mxu0
    %v171 = vpop.f32.mrf.mxu0
    %172 = vdwg.mxu0
    %v173 = vmax.f32 %v168, 0.0
    %v174 = vpack.c.bf16 %v173, %v173
    %v175 = vld [vmem:[#allocation7] sm:$0xf]
    %v176 = vld [vmem:[#allocation7 + $0x4] sm:$0xf]
    %v177 = vld [vmem:[#allocation7 + $0x8] sm:$0xf]
    %v178 = vld [vmem:[#allocation7 + $0xc] sm:$0xf]
    %v179 = vld [vmem:[#allocation7 + $0x10] sm:$0xf]
    %v180 = vld [vmem:[#allocation7 + $0x14] sm:$0xf]
    %v181 = vld [vmem:[#allocation7 + $0x18] sm:$0xf]
    %v182 = vld [vmem:[#allocation7 + $0x1c] sm:$0xf]
    %v183 = vld [vmem:[#allocation7 + $0x20] sm:$0xf]
    %v184 = vld [vmem:[#allocation7 + $0x24] sm:$0xf]
    %v185 = vld [vmem:[#allocation7 + $0x28] sm:$0xf]
    %v186 = vld [vmem:[#allocation7 + $0x2c] sm:$0xf]
    %v187 = vld [vmem:[#allocation7 + $0x30] sm:$0xf]
    %v188 = vld [vmem:[#allocation7 + $0x34] sm:$0xf]
    %v189 = vld [vmem:[#allocation7 + $0x38] sm:$0xf]
    %v190 = vld [vmem:[#allocation7 + $0x3c] sm:$0xf]
    %v191 = vld [vmem:[%s4] sm:$0x1]
    %v193 = vlaneseq
    %v194 = vshrl.u32 %v193, 7
    %v195 = vsub.s32 0, %v194
    %v196 = vrot.slane %v191, %v195
    %v214 = vunpack.c.l.b16 %v175
    %v215 = vunpack.c.l.b16 %v176
    %v216 = vunpack.c.l.b16 %v177
    %v217 = vunpack.c.l.b16 %v178
    %v218 = vunpack.c.l.b16 %v179
    %v219 = vunpack.c.l.b16 %v180
    %v220 = vunpack.c.l.b16 %v181
    %v221 = vunpack.c.l.b16 %v182
    %v222 = vunpack.c.l.b16 %v183
    %v223 = vunpack.c.l.b16 %v184
    %v224 = vunpack.c.l.b16 %v185
    %v225 = vunpack.c.l.b16 %v186
    %v226 = vunpack.c.l.b16 %v187
    %v227 = vunpack.c.l.b16 %v188
    %v228 = vunpack.c.l.b16 %v189
    %v229 = vunpack.c.l.b16 %v190
    %v230 = vpack.c.b16 %v215, %v214
    %v231 = vpack.c.b16 %v217, %v216
    %v232 = vpack.c.b16 %v219, %v218
    %v233 = vpack.c.b16 %v221, %v220
    %v234 = vpack.c.b16 %v223, %v222
    %v235 = vpack.c.b16 %v225, %v224
    %v236 = vpack.c.b16 %v227, %v226
    %v237 = vpack.c.b16 %v229, %v228
    %246 = vmatprep.subr.bf16.mxu0 0
    %247 = vmatpush1.bf16.msra.mxu0 %v237
    %248 = vmatprep.subr.bf16.mxu0 0
    %249 = vmatpush1.bf16.msra.mxu0 %v236
    %250 = vmatprep.subr.bf16.mxu0 0
    %251 = vmatpush1.bf16.msra.mxu0 %v235
    %252 = vmatprep.subr.bf16.mxu0 0
    %253 = vmatpush1.bf16.msra.mxu0 %v234
    %254 = vmatprep.subr.bf16.mxu0 0
    %255 = vmatpush1.bf16.msra.mxu0 %v233
    %256 = vmatprep.subr.bf16.mxu0 0
    %257 = vmatpush1.bf16.msra.mxu0 %v232
    %258 = vmatprep.subr.bf16.mxu0 0
    %259 = vmatpush1.bf16.msra.mxu0 %v231
    %260 = vmatprep.subr.bf16.mxu0 0
    %261 = vmatpush1.bf16.msra.mxu0 %v230
    %262 = vmatprep.subr.bf16.mxu0 0
    %263 = vmatpush2.bf16.msra.mxu0 0
    %264 = vmatprep.subr.bf16.mxu0 0
    %265 = vmatpush2.bf16.msra.mxu0 0
    %266 = vmatprep.subr.bf16.mxu0 0
    %267 = vmatpush2.bf16.msra.mxu0 0
    %268 = vmatprep.subr.bf16.mxu0 0
    %269 = vmatpush2.bf16.msra.mxu0 0
    %270 = vmatprep.subr.bf16.mxu0 0
    %271 = vmatpush2.bf16.msra.mxu0 0
    %272 = vmatprep.subr.bf16.mxu0 0
    %273 = vmatpush2.bf16.msra.mxu0 0
    %274 = vmatprep.subr.bf16.mxu0 0
    %275 = vmatpush2.bf16.msra.mxu0 0
    %276 = vmatprep.subr.bf16.mxu0 0
    %277 = vmatpush2.bf16.msra.mxu0 0
    %278 = vmatprep.mubr.bf16.mxu0 0
    %279 = vmatmul.mubr.bf16.gmra.mxu0 %v174
    %v280 = vpop.f32.mrf.mxu0
    %v281 = vadd.f32 %v196, %v280
    %v282 = vpop.f32.mrf.mxu0
    %v283 = vpop.f32.mrf.mxu0
    %v284 = vpop.f32.mrf.mxu0
    %285 = vdwg.mxu0
    %v286 = vmul.f32 %v281, 0.5
    %v287 = vtanh.pop %v286
    %v288 = vmul.f32 %v287, 0.1
    %v289 = vadd.f32 %v288, 0.8
    %290 = vst [vmem:[#allocation8] sm:$0xff] %v289
    // Predicated region
    $region34: #{tpu_custom_call.1} parent=1 // pred_check
      _
    $region35: #{tpu_custom_call.1} parent=1 // pred_check_branch
      %292 = sbr.rel (0) target = $region37
    $region36: #{tpu_custom_call.1} parent=1 // pred_region
      %s294 = ssub.s32 128, 128
      %295 = vsyncadd [#allocation4], %s294
      %s297 = sshll.u32 [#allocation8], 4
      %s298 = int_to_ptr.vmem [resolvable:$true] %s297
      %300 = dma.vmem_to_hbm [thread:$0]  %s298, 128, %s5, [#allocation4]
    $region37: #{tpu_custom_call.1} parent=1 // pred_fallthru
      _
    // Predicated region
    $region38: #{tpu_custom_call.1} parent=1 // pred_check
      _
    $region39: #{tpu_custom_call.1} parent=1 // pred_check_branch
      %302 = sbr.rel (0) target = $region41
    $region40: #{tpu_custom_call.1} parent=1 // pred_region
      %303 = dma.done [#allocation4], 128
    $region41: #{tpu_custom_call.1} parent=1 // pred_fallthru
      _
    %304 = vsyncpa [#allocation3], 1
    %305 = vsyncpa [#allocation6], 1
    %306 = vsyncpa [#allocation4], 1

</llo_original>
